<compile_context>
chip_gen: v6e
topology: v6e:2x2x1
jax: 0.10.0
libtpu: 0.0.40
codegen_flags: <defaults>
</compile_context>

<pallas_src>
import jax
import jax.numpy as jnp
from jax import lax
from jax.experimental import pallas as pl
from jax.experimental.pallas import tpu as pltpu


def _round_up(v, m):
    return ((v + m - 1) // m) * m


def _tile_candidates(dim, unit, cap=None):
    """Multiples of `unit` that divide `dim`, ascending; fallback = full dim."""
    cands = [t for t in range(unit, dim + 1, unit) if dim % t == 0]
    if not cands:
        cands = [dim]          # non-multiple of 128: use the full extent (no padding)
    if cap is not None:
        capped = [t for t in cands if t <= cap]
        cands = capped if capped else cands[:1]
    return cands


def _vmem_budget_bytes():
    """Generation-aware working-set budget (per TensorCore)."""
    try:
        cap = int(pltpu.get_tpu_info().vmem_capacity_bytes)
    except Exception:
        cap = 64 << 20         # v7x per-core VMEM = smallest across generations
    # ~42 MiB on v7x (64 MiB physical), capped at 80 MiB on v5e/v6e (128 MiB).
    return min(int(0.65 * cap), 80 << 20)


def _working_set_bytes(num_tv, tm, tk, bp, w_bytes=2):
    """Double-buffered inputs + resident f32 output block."""
    per_step_in = (num_tv + 1) * tm * tk * w_bytes + bp * tk * 4 + tm * 4
    return 2 * per_step_in + 2 * bp * tm * 4


def _make_kernel(num_task_vectors):
    """Fused (alpha-merge o linear) kernel.

    The (B, TM) output tile accumulates over the IN (k) grid axis:
        y += x_bf16 @ Wb_bf16.T + sum_n (alpha_n * x)_bf16 @ TVn_bf16.T
    == x @ (W_base + sum_n alpha_n TV_n).T, without any VPU arithmetic on the
    (N+1) bf16 weight tiles.  Accumulation is f32 on the MXU.
    """
    if num_task_vectors == 0:
        def kernel(wbase_ref, x_ref, b_ref, y_ref):
            k = pl.program_id(1)

            @pl.when(k == 0)
            def _init():
                y_ref[...] = jnp.broadcast_to(b_ref[...], y_ref.shape)

            y_ref[...] += lax.dot_general(
                x_ref[...].astype(jnp.bfloat16), wbase_ref[...],
                dimension_numbers=(((1,), (1,)), ((), ())),
                preferred_element_type=jnp.float32)

        return kernel

    def kernel(alpha_ref, tvw_ref, wbase_ref, x_ref, b_ref, y_ref):
        # alpha: (N,) f32 in SMEM; tvw: (N, TM, TK) bf16; wbase: (TM, TK) bf16;
        # x: (B, TK) f32; b: (1, TM) f32 -> y: (B, TM) f32, resident over k.
        k = pl.program_id(1)

        @pl.when(k == 0)
        def _init():
            y_ref[...] = jnp.broadcast_to(b_ref[...], y_ref.shape)

        x_f32 = x_ref[...]                                   # tiny (B, TK) tile
        acc = lax.dot_general(                               # base weights
            x_f32.astype(jnp.bfloat16), wbase_ref[...],
            dimension_numbers=(((1,), (1,)), ((), ())),
            preferred_element_type=jnp.float32)
        for n in range(num_task_vectors):                    # N is small & static
            # scale the small x tile in f32 (v5e has no bf16 VPU), cast, MXU.
            x_scaled = (alpha_ref[n] * x_f32).astype(jnp.bfloat16)
            acc += lax.dot_general(
                x_scaled, tvw_ref[n],
                dimension_numbers=(((1,), (1,)), ((), ())),
                preferred_element_type=jnp.float32)
        y_ref[...] += acc

    return kernel


def prepare_weighted_merge(base_params, task_vectors, *, weight_dtype=jnp.bfloat16):
    """Module-__init__ analog: stack & cast the task vectors ONCE (not per call)."""
    prepared = {
        "w_base": jnp.asarray(base_params["weight"], weight_dtype),       # (OUT, IN)
        "b_base": jnp.asarray(base_params["bias"], jnp.float32),          # (OUT,)
    }
    if task_vectors:
        prepared["tvw"] = jnp.stack(
            [jnp.asarray(tv["weight"], weight_dtype) for tv in task_vectors])  # (N, OUT, IN)
        prepared["tvb"] = jnp.stack(
            [jnp.asarray(tv["bias"], jnp.float32) for tv in task_vectors])     # (N, OUT)
    else:
        prepared["tvw"] = None
        prepared["tvb"] = None
    return prepared


def weighted_merge_model_forward(x, prepared, alpha_raw, *,
                                 normalization="softmax",
                                 max_block_m=None, max_block_k=None):
    """Forward pass of WeightedMergeModel with a single-Linear base model."""
    # ---- `alpha` property (plain-JAX glue) ----
    if normalization == "softmax":
        alpha = jax.nn.softmax(alpha_raw, axis=0)
    elif normalization == "tanh":
        alpha = jnp.tanh(alpha_raw)
    elif normalization == "none":
        alpha = alpha_raw
    else:
        raise ValueError(f"Unsupported normalization method: {normalization}")
    alpha = alpha.astype(jnp.float32)

    w_base = prepared["w_base"]                              # (OUT, IN) bf16
    OUT, IN = w_base.shape
    num_tv = 0 if prepared["tvw"] is None else prepared["tvw"].shape[0]
    B = x.shape[0]
    B_p = _round_up(B, 8)

    # Bias merge is tiny (N*OUT) -> fold it host-side, exact f32 elementwise.
    b_merged = prepared["b_base"]
    if num_tv:
        b_merged = b_merged + jnp.sum(alpha[:, None] * prepared["tvb"], axis=0)
    b_merged = b_merged.reshape(1, OUT).astype(jnp.float32)

    # ---- tile sizes: divisors of OUT/IN (no weight padding), VMEM-budgeted ----
    budget = _vmem_budget_bytes()

    # Keep >= 2 OUT tiles so the "parallel" axis can shard over v7x's 2 cores.
    caps = [c for c in (max_block_m, OUT // 2 if OUT >= 256 else None) if c]
    tm_cap = min(caps) if caps else None

    tk_cands = _tile_candidates(IN, 128, max_block_k)
    tm_cands = _tile_candidates(OUT, 128, tm_cap)

    TM, TK = tm_cands[0], tk_cands[0]
    for t in tk_cands:       # grow the reduction-axis tile first (longer DMA bursts)
        if _working_set_bytes(num_tv, TM, t, B_p) <= budget:
            TK = t
    for t in tm_cands:
        if _working_set_bytes(num_tv, t, TK, B_p) <= budget:
            TM = t
    # TODO(synk): if OUT/IN are not multiples of 128 AND the full-extent tile
    # exceeds the VMEM budget, handle the ragged edge with a clamped index_map
    # + masked store instead of padding the (N+1) weight tensors.

    # Pad only x (batch to a multiple of 8); weights/bias/outputs stay unpadded.
    x_f32 = jnp.asarray(x, jnp.float32)
    if B_p != B:
        x_f32 = jnp.pad(x_f32, ((0, B_p - B), (0, 0)))

    grid = (OUT // TM, IN // TK)
    compiler_params = pltpu.CompilerParams(
        dimension_semantics=("parallel", "arbitrary"),
        vmem_limit_bytes=budget)

    if num_tv:
        y_p = pl.pallas_call(
            _make_kernel(num_tv),
            out_shape=jax.ShapeDtypeStruct((B_p, OUT), jnp.float32),
            grid=grid,
            in_specs=[
                pl.BlockSpec(memory_space=pltpu.MemorySpace.SMEM),        # alpha (N,)
                pl.BlockSpec((num_tv, TM, TK), lambda i, k: (0, i, k)),   # task-vector W (bf16)
                pl.BlockSpec((TM, TK), lambda i, k: (i, k)),              # base W (bf16)
                pl.BlockSpec((B_p, TK), lambda i, k: (0, k)),             # x (f32)
                pl.BlockSpec((1, TM), lambda i, k: (0, i)),               # merged bias (f32)
            ],
            out_specs=pl.BlockSpec((B_p, TM), lambda i, k: (0, i)),       # y resident over k
            compiler_params=compiler_params,
        )(alpha, prepared["tvw"], w_base, x_f32, b_merged)
    else:
        # Edge case: no task vectors -> plain linear with the base weights.
        y_p = pl.pallas_call(
            _make_kernel(0),
            out_shape=jax.ShapeDtypeStruct((B_p, OUT), jnp.float32),
            grid=grid,
            in_specs=[
                pl.BlockSpec((TM, TK), lambda i, k: (i, k)),
                pl.BlockSpec((B_p, TK), lambda i, k: (0, k)),
                pl.BlockSpec((1, TM), lambda i, k: (0, i)),
            ],
            out_specs=pl.BlockSpec((B_p, TM), lambda i, k: (0, i)),
            compiler_params=compiler_params,
        )(w_base, x_f32, b_merged)

    return y_p[:B, :]


if __name__ == "__main__":
    key = jax.random.PRNGKey(0)
    B, IN, OUT = 8, 512, 256      # batch, in_features, out_features (base Linear)
    N_CKPT = 4                    # base + 3 task checkpoints -> 3 task vectors

    keys = jax.random.split(key, 2 * N_CKPT + 2)
    checkpoints = []
    for c in range(N_CKPT):
        w = jax.random.normal(keys[2 * c], (OUT, IN), jnp.float32) * 0.1
        b = jax.random.normal(keys[2 * c + 1], (OUT,), jnp.float32) * 0.1
        checkpoints.append({"weight": w, "bias": b})
    base_params = checkpoints[0]
    task_vectors = [{name: ck[name] - base_params[name] for name in base_params}
                    for ck in checkpoints[1:]]

    # learnable _alpha: one weight per task vector (init ones + small perturbation
    # so the softmax is non-trivial but deterministic)
    n_tv = len(task_vectors)
    alpha_raw = jnp.ones((n_tv,), jnp.float32) \
        + 0.1 * jax.random.normal(keys[-2], (n_tv,), jnp.float32)

    x = jax.random.normal(keys[-1], (B, IN), jnp.float32)

    # Module-init analog: stack + bf16-cast the task-vector weights ONCE.
    prepared = prepare_weighted_merge(base_params, task_vectors)

    # max_block_k=256 at IN=512 forces a 2-step reduction axis so the resident
    # accumulator path is exercised at these small demo shapes; for production
    # shapes drop it and the heuristic grows TK toward the VMEM budget.
    y = weighted_merge_model_forward(x, prepared, alpha_raw,
                                     normalization="softmax", max_block_k=256)
    y = jax.block_until_ready(y)

    # -------- pure-JAX f32 reference --------
    alpha = jax.nn.softmax(alpha_raw, axis=0)
    W_ref = base_params["weight"] + sum(alpha[n] * task_vectors[n]["weight"]
                                        for n in range(n_tv))
    b_ref = base_params["bias"] + sum(alpha[n] * task_vectors[n]["bias"]
                                      for n in range(n_tv))
    y_ref = jnp.dot(x, W_ref.T, precision=jax.lax.Precision.HIGHEST) + b_ref

    # Documented tolerance for the reduced-precision path: weights and x tiles
    # feed the MXU in bf16 (rel err ~2^-9 per operand), accumulation in f32.
    max_err = float(jnp.max(jnp.abs(y - y_ref)))
    assert jnp.allclose(y, y_ref, atol=5e-2, rtol=2e-2), \
        f"output mismatch, max abs err={max_err}"
    print("KERNEL_OK")
</pallas_src>

<mosaic_0001>
module attributes {stable_mosaic.version = 11 : i64} {
  func.func @kernel(%arg0: i32, %arg1: i32, %arg2: memref<3xf32, #tpu.memory_space<smem>>, %arg3: memref<3x128x256xbf16, #tpu.memory_space<vmem>>, %arg4: memref<128x256xbf16, #tpu.memory_space<vmem>>, %arg5: memref<8x256xf32, #tpu.memory_space<vmem>>, %arg6: memref<1x128xf32, #tpu.memory_space<vmem>>, %arg7: memref<8x128xf32, #tpu.memory_space<vmem>>) attributes {dimension_semantics = [#tpu.dimension_semantics<parallel>, #tpu.dimension_semantics<arbitrary>], iteration_bounds = array<i64: 2, 2>, scalar_prefetch = 0 : i64, scratch_operands = 0 : i64, tpu.core_type = #tpu.core_type<tc>, window_params = [{transform_indices = @transform_0, window_bounds = array<i64: 3>}, {transform_indices = @transform_1, window_bounds = array<i64: 3, 128, 256>}, {transform_indices = @transform_2, window_bounds = array<i64: 128, 256>}, {transform_indices = @transform_3, window_bounds = array<i64: 8, 256>}, {transform_indices = @transform_4, window_bounds = array<i64: 1, 128>}, {transform_indices = @transform_5, window_bounds = array<i64: 8, 128>}]} {
    %c0_i32 = arith.constant 0 : i32
    %0 = arith.cmpi eq, %arg1, %c0_i32 : i32
    %1 = arith.extui %0 : i1 to i32
    %c0_i32_0 = arith.constant 0 : i32
    %2 = arith.cmpi ne, %1, %c0_i32_0 : i32
    scf.if %2 {
      %c0_21 = arith.constant 0 : index
      %c0_22 = arith.constant 0 : index
      %34 = vector.load %arg6[%c0_21, %c0_22] : memref<1x128xf32, #tpu.memory_space<vmem>>, vector<1x128xf32>
      %35 = vector.shape_cast %34 : vector<1x128xf32> to vector<1x128xf32>
      %36 = vector.broadcast %35 : vector<1x128xf32> to vector<8x128xf32>
      %c0_23 = arith.constant 0 : index
      %c0_24 = arith.constant 0 : index
      %37 = vector.load %arg7[%c0_23, %c0_24] : memref<8x128xf32, #tpu.memory_space<vmem>>, vector<8x128xf32>
      tpu.vector_store %arg7[%c0_23, %c0_24], %36 {strides = array<i32>} : memref<8x128xf32, #tpu.memory_space<vmem>>, vector<8x128xf32>,
    } else {
    }
    %c0 = arith.constant 0 : index
    %c0_1 = arith.constant 0 : index
    %3 = vector.load %arg5[%c0, %c0_1] : memref<8x256xf32, #tpu.memory_space<vmem>>, vector<8x256xf32>
    %4 = arith.truncf %3 : vector<8x256xf32> to vector<8x256xbf16>
    %c0_2 = arith.constant 0 : index
    %c0_3 = arith.constant 0 : index
    %5 = vector.load %arg4[%c0_2, %c0_3] : memref<128x256xbf16, #tpu.memory_space<vmem>>, vector<128x256xbf16>
    %cst = arith.constant dense<0.000000e+00> : vector<8x128xf32>
    %6 = tpu.matmul %4, %5, %cst {dimension_numbers = #tpu.dot_dimension_numbers<[1], [1], [0], [0], [0, 0, 1, 0], [], []>} : vector<8x256xbf16>, vector<128x256xbf16>, vector<8x128xf32> -> vector<8x128xf32>
    %c0_4 = arith.constant 0 : index
    %7 = memref.load %arg2[%c0_4] : memref<3xf32, #tpu.memory_space<smem>>
    %8 = vector.broadcast %7 : f32 to vector<8x256xf32>
    %9 = arith.mulf %8, %3 : vector<8x256xf32>
    %10 = arith.truncf %9 : vector<8x256xf32> to vector<8x256xbf16>
    %c0_5 = arith.constant 0 : index
    %c0_6 = arith.constant 0 : index
    %c0_7 = arith.constant 0 : index
    %11 = vector.load %arg3[%c0_5, %c0_6, %c0_7] : memref<3x128x256xbf16, #tpu.memory_space<vmem>>, vector<1x128x256xbf16>
    %12 = vector.shape_cast %11 : vector<1x128x256xbf16> to vector<128x256xbf16>
    %cst_8 = arith.constant dense<0.000000e+00> : vector<8x128xf32>
    %13 = tpu.matmul %10, %12, %cst_8 {dimension_numbers = #tpu.dot_dimension_numbers<[1], [1], [0], [0], [0, 0, 1, 0], [], []>} : vector<8x256xbf16>, vector<128x256xbf16>, vector<8x128xf32> -> vector<8x128xf32>
    %14 = arith.addf %6, %13 : vector<8x128xf32>
    %c1 = arith.constant 1 : index
    %15 = memref.load %arg2[%c1] : memref<3xf32, #tpu.memory_space<smem>>
    %16 = vector.broadcast %15 : f32 to vector<8x256xf32>
    %17 = arith.mulf %16, %3 : vector<8x256xf32>
    %18 = arith.truncf %17 : vector<8x256xf32> to vector<8x256xbf16>
    %c1_9 = arith.constant 1 : index
    %c0_10 = arith.constant 0 : index
    %c0_11 = arith.constant 0 : index
    %19 = vector.load %arg3[%c1_9, %c0_10, %c0_11] : memref<3x128x256xbf16, #tpu.memory_space<vmem>>, vector<1x128x256xbf16>
    %20 = vector.shape_cast %19 : vector<1x128x256xbf16> to vector<128x256xbf16>
    %cst_12 = arith.constant dense<0.000000e+00> : vector<8x128xf32>
    %21 = tpu.matmul %18, %20, %cst_12 {dimension_numbers = #tpu.dot_dimension_numbers<[1], [1], [0], [0], [0, 0, 1, 0], [], []>} : vector<8x256xbf16>, vector<128x256xbf16>, vector<8x128xf32> -> vector<8x128xf32>
    %22 = arith.addf %14, %21 : vector<8x128xf32>
    %c2 = arith.constant 2 : index
    %23 = memref.load %arg2[%c2] : memref<3xf32, #tpu.memory_space<smem>>
    %24 = vector.broadcast %23 : f32 to vector<8x256xf32>
    %25 = arith.mulf %24, %3 : vector<8x256xf32>
    %26 = arith.truncf %25 : vector<8x256xf32> to vector<8x256xbf16>
    %c2_13 = arith.constant 2 : index
    %c0_14 = arith.constant 0 : index
    %c0_15 = arith.constant 0 : index
    %27 = vector.load %arg3[%c2_13, %c0_14, %c0_15] : memref<3x128x256xbf16, #tpu.memory_space<vmem>>, vector<1x128x256xbf16>
    %28 = vector.shape_cast %27 : vector<1x128x256xbf16> to vector<128x256xbf16>
    %cst_16 = arith.constant dense<0.000000e+00> : vector<8x128xf32>
    %29 = tpu.matmul %26, %28, %cst_16 {dimension_numbers = #tpu.dot_dimension_numbers<[1], [1], [0], [0], [0, 0, 1, 0], [], []>} : vector<8x256xbf16>, vector<128x256xbf16>, vector<8x128xf32> -> vector<8x128xf32>
    %30 = arith.addf %22, %29 : vector<8x128xf32>
    %c0_17 = arith.constant 0 : index
    %c0_18 = arith.constant 0 : index
    %31 = vector.load %arg7[%c0_17, %c0_18] : memref<8x128xf32, #tpu.memory_space<vmem>>, vector<8x128xf32>
    %32 = arith.addf %31, %30 : vector<8x128xf32>
    %c0_19 = arith.constant 0 : index
    %c0_20 = arith.constant 0 : index
    %33 = vector.load %arg7[%c0_19, %c0_20] : memref<8x128xf32, #tpu.memory_space<vmem>>, vector<8x128xf32>
    tpu.vector_store %arg7[%c0_19, %c0_20], %32 {strides = array<i32>} : memref<8x128xf32, #tpu.memory_space<vmem>>, vector<8x128xf32>,
    return
  }
  func.func @transform_0(%arg0: i32, %arg1: i32) -> i32 {
    %c0_i32 = arith.constant 0 : i32
    %c0_i32_0 = arith.constant 0 : i32
    return %c0_i32 : i32
  }
  func.func @transform_1(%arg0: i32, %arg1: i32) -> (i32, i32, i32) {
    %c0_i32 = arith.constant 0 : i32
    %c0_i32_0 = arith.constant 0 : i32
    return %c0_i32, %arg0, %arg1 : i32, i32, i32
  }
  func.func @transform_2(%arg0: i32, %arg1: i32) -> (i32, i32) {
    %c0_i32 = arith.constant 0 : i32
    return %arg0, %arg1 : i32, i32
  }
  func.func @transform_3(%arg0: i32, %arg1: i32) -> (i32, i32) {
    %c0_i32 = arith.constant 0 : i32
    %c0_i32_0 = arith.constant 0 : i32
    return %c0_i32, %arg1 : i32, i32
  }
  func.func @transform_4(%arg0: i32, %arg1: i32) -> (i32, i32) {
    %c0_i32 = arith.constant 0 : i32
    %c0_i32_0 = arith.constant 0 : i32
    return %c0_i32, %arg0 : i32, i32
  }
  func.func @transform_5(%arg0: i32, %arg1: i32) -> (i32, i32) {
    %c0_i32 = arith.constant 0 : i32
    %c0_i32_0 = arith.constant 0 : i32
    return %c0_i32, %arg0 : i32, i32
  }
}

</mosaic_0001>

<llo_original>
// kernel: tpu_custom_call.1
$region0: #{tpu_custom_call.1}
  #allocation0 [shape = 'u32[]', space=smem, size = 0x4, offset = 0x4, fixed_abs, tag = 'smem constant byte address 0x4 - core index']
  #allocation1 [shape = 'u32[144,128]{1,0:T(1,128)}', space=vmem, size = 0x12000, scoped, tag = 'internal scratch']
  #allocation11 [shape = 's32[]', space=sflag, size = 0x4, offset = 0, fixed_abs, tag = 'sflag constant byte address 0x0 - dummy sync flag']
  %s0 = inlined_call_operand.hbm [shape: f32[3], index: 0, kind: input, shape index: {}]
  %s1 = inlined_call_operand.hbm [shape: bf16[3,256,512], index: 1, kind: input, shape index: {}]
  %s2 = inlined_call_operand.hbm [shape: bf16[256,512], index: 2, kind: input, shape index: {}]
  %s3 = inlined_call_operand.hbm [shape: f32[8,512], index: 3, kind: input, shape index: {}]
  %s4 = inlined_call_operand.vmem [shape: f32[1,256], index: 4, kind: input, shape index: {}]
  %s5 = inlined_call_operand.hbm [shape: f32[8,256], index: 5, kind: output, shape index: {}]
  %s6 = sld [smem:[#allocation0]]
  $region73: #{tpu_custom_call.1} parent=0
    _
  %s8 = ssub.s32 1, %s6
  %s9 = scalar_select 0, %s8, %s6
  $region1: #{tpu_custom_call.1} parent=0
    #allocation2 [shape = 'u8[512]{0}', space=smem, size = 0x200, scoped, tag = 'input window, operand 0, single buffered']
    #allocation3 [shape = 's32[2]{0}', space=sflag, size = 0x8, scoped, tag = 'scoped memory for tpu_custom_call.1']
    #allocation4 [shape = 's32[2]{0}', space=sflag, size = 0x8, scoped, tag = 'scoped memory for tpu_custom_call.1']
    #allocation5 [shape = 's32[2]{0}', space=sflag, size = 0x8, scoped, tag = 'scoped memory for tpu_custom_call.1']
    #allocation6 [shape = 'u8[393216]{0}', space=vmem, size = 0x60000, scoped, tag = 'input window, operand 1']
    #allocation7 [shape = 'u8[131072]{0}', space=vmem, size = 0x20000, scoped, tag = 'input window, operand 2']
    #allocation8 [shape = 's32[2]{0}', space=sflag, size = 0x8, scoped, tag = 'scoped memory for tpu_custom_call.1']
    #allocation9 [shape = 'u8[16384]{0}', space=vmem, size = 0x4000, scoped, tag = 'input window, operand 3']
    #allocation10 [shape = 'u8[8192]{0}', space=vmem, size = 0x2000, scoped, tag = 'output window, operand 0']
    %10 = vsyncpa [#allocation5], 0
    %11 = vsyncpa [#allocation3], 0
    %s12 = scalar_lea.sflag [#allocation3], 1
    %13 = vsyncpa %s12, 0
    %14 = vsyncpa [#allocation8], 0
    %s15 = scalar_lea.sflag [#allocation8], 1
    %16 = vsyncpa %s15, 0
    %17 = vsyncpa [#allocation4], 0
    %s18 = scalar_lea.sflag [#allocation4], 1
    %19 = vsyncpa %s18, 0
    loop: start=0, step=1, limit=6
    $region2: #{tpu_custom_call.1} parent=1 // loop_pre_header
      _
    $region3: #{tpu_custom_call.1} parent=1 // loop_header
      %s21 = sphi 0, %s25
      %p22 = scmp.ge.s32.totalorder %s21, 6
      %s28 = sphi 0, %s40
      %s29 = sphi 0, %s36
      %s30 = sphi 0, %s28
      %s31 = sphi 0, %s29
      %s32 = sphi 0, %s30
      %s33 = sphi 0, %s31
      %s41 = sphi 0, %s41
      %s43 = sphi 0, %s41
      %s44 = sphi 0, %s43
      %s58 = sphi 0, %s44
      %s66 = sphi 0, %s68
      %s69 = sphi 0, %s66
      %s70 = sphi 0, %s69
      %s86 = sphi 0, %s70
      %s94 = sphi 0, %s96
      %s97 = sphi 0, %s94
      %s98 = sphi 0, %s97
      %s114 = sphi 0, %s98
      %s120 = sphi 0, %s122
      %s123 = sphi 0, %s120
      %s124 = sphi 0, %s123
      %s140 = sphi 0, %s124
      %s146 = sphi 0, %s148
      %s149 = sphi 0, %s146
      %s150 = sphi 0, %s149
      %s166 = sphi 0, %s150
      %s172 = sphi 0, %s174
      %s175 = sphi 0, %s172
      %s176 = sphi 0, %s175
      %s192 = sphi 0, %s176
    $region4: #{tpu_custom_call.1} parent=1 // loop_header_branch
      %24 = sbr.rel (%p22) target = $region8
    $region5: #{tpu_custom_call.1} parent=1 // loop_body
      %s26 = ssub.s32 %s21, 1
      %s27 = ssub.s32 %s21, 2
      %s34 = sadd.s32 1, %s29
      %p35 = scmp.ge.s32.totalorder %s34, 2
      %s36 = scalar_select %p35, 0, %s34
      %s37 = sadd.s32 1, %s28
      %s38 = scalar_select %p35, %s37, %s28
      %p39 = scmp.ge.s32.totalorder %s38, 2
      %s40 = scalar_select %p39, 0, %s38
      %s42 = sadd.s32 %s41, 1
      %p45 = scmp.eq.s32.totalorder %s21, 3
      %p46 = scmp.ne.s32.totalorder %s41, %s43
      %p47 = scmp.eq.s32.totalorder %s21, 0
      %p48 = por %p46, %p47
      %p49 = scmp.ne.s32.totalorder %s41, %s43
      %p50 = scmp.eq.s32.totalorder %s26, 3
      %p51 = por %p49, %p50
      %p52 = scmp.ne.s32.totalorder %s43, %s44
      %p53 = scmp.eq.s32.totalorder %s26, 0
      %p54 = por %p52, %p53
      %p55 = scmp.ne.s32.totalorder %s43, %s44
      %p56 = scmp.eq.s32.totalorder %s27, 3
      %p57 = por %p55, %p56
      %p59 = scmp.ne.s32.totalorder %s44, %s58
      %p60 = scmp.eq.s32.totalorder %s27, 0
      %p61 = por %p59, %p60
      %s62 = ssub.s32 %s28, %s40
      %s63 = ssub.s32 %s29, %s36
      %s64 = sor.u32 %s62, %s63
      %p65 = scmp.eq.s32.totalorder %s64, 0
      %s67 = sadd.s32 %s66, 1
      %s68 = scalar_select %p65, %s66, %s67
      %p71 = pneg %p65
      %p72 = scmp.eq.s32.totalorder %s21, 3
      %p73 = por %p71, %p72
      %p74 = scmp.ne.s32.totalorder %s66, %s69
      %p75 = scmp.eq.s32.totalorder %s21, 0
      %p76 = por %p74, %p75
      %p77 = scmp.ne.s32.totalorder %s66, %s69
      %p78 = scmp.eq.s32.totalorder %s26, 3
      %p79 = por %p77, %p78
      %p80 = scmp.ne.s32.totalorder %s69, %s70
      %p81 = scmp.eq.s32.totalorder %s26, 0
      %p82 = por %p80, %p81
      %p83 = scmp.ne.s32.totalorder %s69, %s70
      %p84 = scmp.eq.s32.totalorder %s27, 3
      %p85 = por %p83, %p84
      %p87 = scmp.ne.s32.totalorder %s70, %s86
      %p88 = scmp.eq.s32.totalorder %s27, 0
      %p89 = por %p87, %p88
      %s90 = ssub.s32 %s28, %s40
      %s91 = ssub.s32 %s29, %s36
      %s92 = sor.u32 %s90, %s91
      %p93 = scmp.eq.s32.totalorder %s92, 0
      %s95 = sadd.s32 %s94, 1
      %s96 = scalar_select %p93, %s94, %s95
      %p99 = pneg %p93
      %p100 = scmp.eq.s32.totalorder %s21, 3
      %p101 = por %p99, %p100
      %p102 = scmp.ne.s32.totalorder %s94, %s97
      %p103 = scmp.eq.s32.totalorder %s21, 0
      %p104 = por %p102, %p103
      %p105 = scmp.ne.s32.totalorder %s94, %s97
      %p106 = scmp.eq.s32.totalorder %s26, 3
      %p107 = por %p105, %p106
      %p108 = scmp.ne.s32.totalorder %s97, %s98
      %p109 = scmp.eq.s32.totalorder %s26, 0
      %p110 = por %p108, %p109
      %p111 = scmp.ne.s32.totalorder %s97, %s98
      %p112 = scmp.eq.s32.totalorder %s27, 3
      %p113 = por %p111, %p112
      %p115 = scmp.ne.s32.totalorder %s98, %s114
      %p116 = scmp.eq.s32.totalorder %s27, 0
      %p117 = por %p115, %p116
      %s118 = ssub.s32 %s29, %s36
      %p119 = scmp.eq.s32.totalorder %s118, 0
      %s121 = sadd.s32 %s120, 1
      %s122 = scalar_select %p119, %s120, %s121
      %p125 = pneg %p119
      %p126 = scmp.eq.s32.totalorder %s21, 3
      %p127 = por %p125, %p126
      %p128 = scmp.ne.s32.totalorder %s120, %s123
      %p129 = scmp.eq.s32.totalorder %s21, 0
      %p130 = por %p128, %p129
      %p131 = scmp.ne.s32.totalorder %s120, %s123
      %p132 = scmp.eq.s32.totalorder %s26, 3
      %p133 = por %p131, %p132
      %p134 = scmp.ne.s32.totalorder %s123, %s124
      %p135 = scmp.eq.s32.totalorder %s26, 0
      %p136 = por %p134, %p135
      %p137 = scmp.ne.s32.totalorder %s123, %s124
      %p138 = scmp.eq.s32.totalorder %s27, 3
      %p139 = por %p137, %p138
      %p141 = scmp.ne.s32.totalorder %s124, %s140
      %p142 = scmp.eq.s32.totalorder %s27, 0
      %p143 = por %p141, %p142
      %s144 = ssub.s32 %s28, %s40
      %p145 = scmp.eq.s32.totalorder %s144, 0
      %s147 = sadd.s32 %s146, 1
      %s148 = scalar_select %p145, %s146, %s147
      %p151 = pneg %p145
      %p152 = scmp.eq.s32.totalorder %s21, 3
      %p153 = por %p151, %p152
      %p154 = scmp.ne.s32.totalorder %s146, %s149
      %p155 = scmp.eq.s32.totalorder %s21, 0
      %p156 = por %p154, %p155
      %p157 = scmp.ne.s32.totalorder %s146, %s149
      %p158 = scmp.eq.s32.totalorder %s26, 3
      %p159 = por %p157, %p158
      %p160 = scmp.ne.s32.totalorder %s149, %s150
      %p161 = scmp.eq.s32.totalorder %s26, 0
      %p162 = por %p160, %p161
      %p163 = scmp.ne.s32.totalorder %s149, %s150
      %p164 = scmp.eq.s32.totalorder %s27, 3
      %p165 = por %p163, %p164
      %p167 = scmp.ne.s32.totalorder %s150, %s166
      %p168 = scmp.eq.s32.totalorder %s27, 0
      %p169 = por %p167, %p168
      %s170 = ssub.s32 %s28, %s40
      %p171 = scmp.eq.s32.totalorder %s170, 0
      %s173 = sadd.s32 %s172, 1
      %s174 = scalar_select %p171, %s172, %s173
      %p177 = pneg %p171
      %p178 = scmp.eq.s32.totalorder %s21, 3
      %p179 = por %p177, %p178
      %p180 = scmp.ne.s32.totalorder %s172, %s175
      %p181 = scmp.eq.s32.totalorder %s21, 0
      %p182 = por %p180, %p181
      %p183 = scmp.ne.s32.totalorder %s172, %s175
      %p184 = scmp.eq.s32.totalorder %s26, 3
      %p185 = por %p183, %p184
      %p186 = scmp.ne.s32.totalorder %s175, %s176
      %p187 = scmp.eq.s32.totalorder %s26, 0
      %p188 = por %p186, %p187
      %p189 = scmp.ne.s32.totalorder %s175, %s176
      %p190 = scmp.eq.s32.totalorder %s27, 3
      %p191 = por %p189, %p190
      %p193 = scmp.ne.s32.totalorder %s176, %s192
      %p194 = scmp.eq.s32.totalorder %s27, 0
      %p195 = por %p193, %p194
      %p196 = scmp.le.s32.totalorder 1, %s21
      %p197 = scmp.lt.s32.totalorder %s21, 5
      %p198 = pnand %p196, %p197
      %p199 = pneg %p198
      // Predicated region
      $region9: #{tpu_custom_call.1} parent=5 // pred_check
        _
      $region10: #{tpu_custom_call.1} parent=5 // pred_check_branch
        %201 = sbr.rel (%p198) target = $region12
      $region11: #{tpu_custom_call.1} parent=5 // pred_region
        %s202 = ssub.s32 %s21, 1
        // Predicated region
        $region13: #{tpu_custom_call.1} parent=11 // pred_check
          %p203 = pneg %p54
        $region14: #{tpu_custom_call.1} parent=11 // pred_check_branch
          %205 = sbr.rel (%p203) target = $region16
        $region15: #{tpu_custom_call.1} parent=11 // pred_region
          %s207 = ssub.s32 16, 16
          %208 = vsyncadd [#allocation5], %s207
          %211 = dma.hbm_to_smem %s0, 16, [#allocation2], [#allocation5]
        $region16: #{tpu_custom_call.1} parent=11 // pred_fallthru
          _
      $region12: #{tpu_custom_call.1} parent=5 // pred_fallthru
        _
      %p212 = scmp.lt.s32.totalorder %s21, 4
      // Predicated region
      $region17: #{tpu_custom_call.1} parent=5 // pred_check
        %p213 = pneg %p212
      $region18: #{tpu_custom_call.1} parent=5 // pred_check_branch
        %215 = sbr.rel (%p213) target = $region20
      $region19: #{tpu_custom_call.1} parent=5 // pred_region
        // Predicated region
        $region21: #{tpu_custom_call.1} parent=19 // pred_check
          %p216 = pneg %p76
        $region22: #{tpu_custom_call.1} parent=19 // pred_check_branch
          %218 = sbr.rel (%p216) target = $region24
        $region23: #{tpu_custom_call.1} parent=19 // pred_region
          #allocation12 [shape = 'u32[6]{0}', space=smem, size = 0x18, scoped, tag = 'DMA stride descriptor']
          %s219 = sand.u32 %s66, 1
          %s220 = scalar_lea.sflag [#allocation3], %s219
          %s221 = sand.u32 %s66, 1
          %s222 = smul.addr %s221, 384
          %s223 = scalar_lea.vmem [#allocation6], %s222
          %s224 = smul.u32 16, %s28
          %s225 = smul.u32 2, %s29
          %s227 = ssub.s32 6144, 6144
          %228 = vsyncadd %s220, %s227
          %s229 = smul.addr %s224, 4
          %s230 = sadd.s32 %s225, %s229
          %s231 = smul.addr %s230, 64
          %s232 = scalar_lea.hbm %s1, %s231
          %s234 = sshll.u32 1, 14
          %s235 = sxor.u32 4294967295, %s234
          %s237 = sld [smem:[#allocation0]]
          %s238 = sadd.s32 2, %s237
          %s240 = sshll.u32 7, 26
          %s241 = sxor.u32 4294967295, %s240
          %s242 = sand.u32 0, %s241
          %s243 = sshll.u32 %s238, 26
          %s244 = sor.u32 %s242, %s243
          %s245 = sshll.u32 %s223, 4
          %s246 = int_to_ptr.vmem [resolvable:$true] %s245
          %252 = sst [smem:[#allocation12]] 8192
          %s253 = scalar_lea.smem [#allocation12], 1
          %254 = sst [smem:[%s253]] 2048
          %s255 = scalar_lea.smem [#allocation12], 2
          %256 = sst [smem:[%s255]] 16
          %s257 = scalar_lea.smem [#allocation12], 3
          %258 = sst [smem:[%s257]] 256
          %s259 = scalar_lea.smem [#allocation12], 4
          %260 = sst [smem:[%s259]] 128
          %s261 = scalar_lea.smem [#allocation12], 5
          %262 = sst [smem:[%s261]] 8
          %264 = dma.general %s232, 6144, %s246, %s220, 131072, [#allocation12], %s244, 0
        $region24: #{tpu_custom_call.1} parent=19 // pred_fallthru
          _
        // Predicated region
        $region25: #{tpu_custom_call.1} parent=19 // pred_check
          %p265 = pneg %p104
        $region26: #{tpu_custom_call.1} parent=19 // pred_check_branch
          %267 = sbr.rel (%p265) target = $region28
        $region27: #{tpu_custom_call.1} parent=19 // pred_region
          %s268 = sand.u32 %s21, 1
          %s269 = scalar_lea.sflag [#allocation8], %s268
          %s270 = sand.u32 %s94, 1
          %s271 = smul.addr %s270, 128
          %s272 = scalar_lea.vmem [#allocation7], %s271
          %s273 = smul.u32 16, %s28
          %s274 = smul.u32 2, %s29
          %s276 = ssub.s32 2048, 2048
          %277 = vsyncadd %s269, %s276
          %s278 = smul.addr %s273, 4
          %s279 = sadd.s32 %s274, %s278
          %s280 = smul.addr %s279, 64
          %s281 = scalar_lea.hbm %s2, %s280
          %s282 = sshll.u32 %s272, 4
          %s283 = int_to_ptr.vmem [resolvable:$true] %s282
          %288 = dma.hbm_to_vmem [thread:$0]  %s281, 2048, %s283, %s269, 256, 128, 8
        $region28: #{tpu_custom_call.1} parent=19 // pred_fallthru
          _
        // Predicated region
        $region29: #{tpu_custom_call.1} parent=19 // pred_check
          %p289 = pneg %p130
        $region30: #{tpu_custom_call.1} parent=19 // pred_check_branch
          %291 = sbr.rel (%p289) target = $region32
        $region31: #{tpu_custom_call.1} parent=19 // pred_region
          %s292 = sand.u32 %s21, 1
          %s293 = scalar_lea.sflag [#allocation8], %s292
          %s294 = sand.u32 %s120, 1
          %s295 = smul.addr %s294, 16
          %s296 = scalar_lea.vmem [#allocation9], %s295
          %s297 = smul.u32 2, %s29
          %s299 = ssub.s32 256, 256
          %300 = vsyncadd %s293, %s299
          %s301 = smul.addr %s297, 128
          %s302 = scalar_lea.hbm %s3, %s301
          %s304 = sshll.u32 %s296, 4
          %s305 = int_to_ptr.vmem [resolvable:$true] %s304
          %307 = dma.hbm_to_vmem [thread:$0]  %s302, 256, %s305, %s293
        $region32: #{tpu_custom_call.1} parent=19 // pred_fallthru
          _
        // Predicated region
        $region33: #{tpu_custom_call.1} parent=19 // pred_check
          %p308 = pneg %p156
        $region34: #{tpu_custom_call.1} parent=19 // pred_check_branch
          %310 = sbr.rel (%p308) target = $region36
        $region35: #{tpu_custom_call.1} parent=19 // pred_region
          %p311 = scmp.lt.s32.totalorder %s28, 1
          %s312 = scalar_select %p311, %s28, 1
          %s313 = scalar_lea.vmem %s4, %s312
        $region36: #{tpu_custom_call.1} parent=19 // pred_fallthru
          _
      $region20: #{tpu_custom_call.1} parent=5 // pred_fallthru
        _
      %p314 = scmp.le.s32.totalorder 1, %s21
      %p315 = scmp.lt.s32.totalorder %s21, 5
      %p316 = pnand %p314, %p315
      %p317 = pneg %p316
      // Predicated region
      $region37: #{tpu_custom_call.1} parent=5 // pred_check
        _
      $region38: #{tpu_custom_call.1} parent=5 // pred_check_branch
        %319 = sbr.rel (%p316) target = $region40
      $region39: #{tpu_custom_call.1} parent=5 // pred_region
        %s320 = ssub.s32 %s21, 1
        // Predicated region
        $region41: #{tpu_custom_call.1} parent=39 // pred_check
          %p321 = pneg %p54
        $region42: #{tpu_custom_call.1} parent=39 // pred_check_branch
          %323 = sbr.rel (%p321) target = $region44
        $region43: #{tpu_custom_call.1} parent=39 // pred_region
          %324 = dma.done [#allocation5], 16
        $region44: #{tpu_custom_call.1} parent=39 // pred_fallthru
          _
        %s325 = sand.u32 %s69, 1
        %s326 = scalar_lea.sflag [#allocation3], %s325
        %s327 = sand.u32 %s69, 1
        %s328 = smul.addr %s327, 384
        %s329 = scalar_lea.vmem [#allocation6], %s328
        // Predicated region
        $region45: #{tpu_custom_call.1} parent=39 // pred_check
          %p330 = pneg %p82
        $region46: #{tpu_custom_call.1} parent=39 // pred_check_branch
          %332 = sbr.rel (%p330) target = $region48
        $region47: #{tpu_custom_call.1} parent=39 // pred_region
          %333 = dma.done %s326, 6144
        $region48: #{tpu_custom_call.1} parent=39 // pred_fallthru
          _
        %s334 = sand.u32 %s26, 1
        %s335 = scalar_lea.sflag [#allocation8], %s334
        %s336 = sand.u32 %s97, 1
        %s337 = smul.addr %s336, 128
        %s338 = scalar_lea.vmem [#allocation7], %s337
        // Predicated region
        $region49: #{tpu_custom_call.1} parent=39 // pred_check
          %p339 = pneg %p110
        $region50: #{tpu_custom_call.1} parent=39 // pred_check_branch
          %341 = sbr.rel (%p339) target = $region52
        $region51: #{tpu_custom_call.1} parent=39 // pred_region
          %342 = dma.done %s335, 2048
        $region52: #{tpu_custom_call.1} parent=39 // pred_fallthru
          _
        %s343 = sand.u32 %s26, 1
        %s344 = scalar_lea.sflag [#allocation8], %s343
        %s345 = sand.u32 %s123, 1
        %s346 = smul.addr %s345, 16
        %s347 = scalar_lea.vmem [#allocation9], %s346
        // Predicated region
        $region53: #{tpu_custom_call.1} parent=39 // pred_check
          %p348 = pneg %p136
        $region54: #{tpu_custom_call.1} parent=39 // pred_check_branch
          %350 = sbr.rel (%p348) target = $region56
        $region55: #{tpu_custom_call.1} parent=39 // pred_region
          %351 = dma.done %s344, 256
        $region56: #{tpu_custom_call.1} parent=39 // pred_fallthru
          _
        %352 = sfence
        %p353 = pneg %p54
        %p354 = pneg %p51
        %s355 = sand.u32 %s69, 1
        %s356 = scalar_lea.sflag [#allocation3], %s355
        %s357 = sand.u32 %s69, 1
        %s358 = smul.addr %s357, 384
        %s359 = scalar_lea.vmem [#allocation6], %s358
        %p360 = pneg %p82
        %p361 = pneg %p79
        %s362 = sand.u32 %s26, 1
        %s363 = scalar_lea.sflag [#allocation8], %s362
        %s364 = sand.u32 %s97, 1
        %s365 = smul.addr %s364, 128
        %s366 = scalar_lea.vmem [#allocation7], %s365
        %p367 = pneg %p110
        %p368 = pneg %p107
        %s369 = sand.u32 %s26, 1
        %s370 = scalar_lea.sflag [#allocation8], %s369
        %s371 = sand.u32 %s123, 1
        %s372 = smul.addr %s371, 16
        %s373 = scalar_lea.vmem [#allocation9], %s372
        %p374 = pneg %p136
        %p375 = pneg %p133
        %p376 = scmp.lt.s32.totalorder %s30, 1
        %s377 = scalar_select %p376, %s30, 1
        %s378 = scalar_lea.vmem %s4, %s377
        %p379 = pneg %p162
        %p380 = pneg %p159
        %p381 = pneg %p188
        %p382 = pneg %p185
        %s383 = sand.u32 %s175, 1
        %s384 = scalar_lea.sflag [#allocation4], %s383
        %s385 = sand.u32 %s175, 1
        %s386 = smul.addr %s385, 8
        %s387 = scalar_lea.vmem [#allocation10], %s386
        %s388 = smul.u32 16, %s30
        %s389 = smul.u32 2, %s31
        %s390 = smul.u32 16, %s30
        %s391 = smul.u32 2, %s31
        %s392 = smul.u32 2, %s31
        %p393 = scmp.lt.s32.totalorder %s30, 1
        %s394 = scalar_select %p393, %s30, 1
        %s395 = scalar_lea.vmem %s4, %s394
        %p397 = scmp.eq.s32.totalorder %s31, 0
        // Predicated region
        $region57: #{tpu_custom_call.1} parent=39 // pred_check
          %p398 = pneg %p397
        $region58: #{tpu_custom_call.1} parent=39 // pred_check_branch
          %400 = sbr.rel (%p398) target = $region60
        $region59: #{tpu_custom_call.1} parent=39 // pred_region
          %v401 = vld [vmem:[%s395] sm:$0x1]
          %v403 = vlaneseq
          %v404 = vshrl.u32 %v403, 7
          %v405 = vsub.s32 0, %v404
          %v406 = vrot.slane %v401, %v405
          %408 = vst [vmem:[%s387] sm:$0xff] %v406
        $region60: #{tpu_custom_call.1} parent=39 // pred_fallthru
          _
        %v409 = vld [vmem:[%s347] sm:$0xff]
        %v410 = vld [vmem:[%s347 + $0x8] sm:$0xff]
        %v411 = vpack.c.bf16 %v409, %v409
        %v412 = vpack.c.bf16 %v410, %v410
        %v413 = vld [vmem:[%s338] sm:$0xff]
        %v414 = vld [vmem:[%s338 + $0x8] sm:$0xff]
        %v415 = vld [vmem:[%s338 + $0x10] sm:$0xff]
        %v416 = vld [vmem:[%s338 + $0x18] sm:$0xff]
        %v417 = vld [vmem:[%s338 + $0x20] sm:$0xff]
        %v418 = vld [vmem:[%s338 + $0x28] sm:$0xff]
        %v419 = vld [vmem:[%s338 + $0x30] sm:$0xff]
        %v420 = vld [vmem:[%s338 + $0x38] sm:$0xff]
        %v421 = vld [vmem:[%s338 + $0x40] sm:$0xff]
        %v422 = vld [vmem:[%s338 + $0x48] sm:$0xff]
        %v423 = vld [vmem:[%s338 + $0x50] sm:$0xff]
        %v424 = vld [vmem:[%s338 + $0x58] sm:$0xff]
        %v425 = vld [vmem:[%s338 + $0x60] sm:$0xff]
        %v426 = vld [vmem:[%s338 + $0x68] sm:$0xff]
        %v427 = vld [vmem:[%s338 + $0x70] sm:$0xff]
        %v428 = vld [vmem:[%s338 + $0x78] sm:$0xff]
        %s429 = sld [smem:[#allocation2]]
        %v430 = vstv %s429
        %v431 = vmul.f32 %v430, %v409
        %v432 = vmul.f32 %v430, %v410
        %v433 = vpack.c.bf16 %v431, %v431
        %v434 = vpack.c.bf16 %v432, %v432
        %v435 = vld [vmem:[%s329] sm:$0xff]
        %v436 = vld [vmem:[%s329 + $0x8] sm:$0xff]
        %v437 = vld [vmem:[%s329 + $0x10] sm:$0xff]
        %v438 = vld [vmem:[%s329 + $0x18] sm:$0xff]
        %v439 = vld [vmem:[%s329 + $0x20] sm:$0xff]
        %v440 = vld [vmem:[%s329 + $0x28] sm:$0xff]
        %v441 = vld [vmem:[%s329 + $0x30] sm:$0xff]
        %v442 = vld [vmem:[%s329 + $0x38] sm:$0xff]
        %v443 = vld [vmem:[%s329 + $0x40] sm:$0xff]
        %v444 = vld [vmem:[%s329 + $0x48] sm:$0xff]
        %v445 = vld [vmem:[%s329 + $0x50] sm:$0xff]
        %v446 = vld [vmem:[%s329 + $0x58] sm:$0xff]
        %v447 = vld [vmem:[%s329 + $0x60] sm:$0xff]
        %v448 = vld [vmem:[%s329 + $0x68] sm:$0xff]
        %v449 = vld [vmem:[%s329 + $0x70] sm:$0xff]
        %v450 = vld [vmem:[%s329 + $0x78] sm:$0xff]
        %v467 = vunpack.c.l.b16 %v435
        %v468 = vunpack.c.h.b16 %v435
        %v469 = vunpack.c.l.b16 %v436
        %v470 = vunpack.c.h.b16 %v436
        %v471 = vunpack.c.l.b16 %v437
        %v472 = vunpack.c.h.b16 %v437
        %v473 = vunpack.c.l.b16 %v438
        %v474 = vunpack.c.h.b16 %v438
        %v475 = vunpack.c.l.b16 %v439
        %v476 = vunpack.c.h.b16 %v439
        %v477 = vunpack.c.l.b16 %v440
        %v478 = vunpack.c.h.b16 %v440
        %v479 = vunpack.c.l.b16 %v441
        %v480 = vunpack.c.h.b16 %v441
        %v481 = vunpack.c.l.b16 %v442
        %v482 = vunpack.c.h.b16 %v442
        %v483 = vunpack.c.l.b16 %v443
        %v484 = vunpack.c.h.b16 %v443
        %v485 = vunpack.c.l.b16 %v444
        %v486 = vunpack.c.h.b16 %v444
        %v487 = vunpack.c.l.b16 %v445
        %v488 = vunpack.c.h.b16 %v445
        %v489 = vunpack.c.l.b16 %v446
        %v490 = vunpack.c.h.b16 %v446
        %v491 = vunpack.c.l.b16 %v447
        %v492 = vunpack.c.h.b16 %v447
        %v493 = vunpack.c.l.b16 %v448
        %v494 = vunpack.c.h.b16 %v448
        %v495 = vunpack.c.l.b16 %v449
        %v496 = vunpack.c.h.b16 %v449
        %v497 = vunpack.c.l.b16 %v450
        %v498 = vunpack.c.h.b16 %v450
        %v499 = vpack.c.b16 %v469, %v467
        %v500 = vpack.c.b16 %v470, %v468
        %v501 = vpack.c.b16 %v473, %v471
        %v502 = vpack.c.b16 %v474, %v472
        %v503 = vpack.c.b16 %v477, %v475
        %v504 = vpack.c.b16 %v478, %v476
        %v505 = vpack.c.b16 %v481, %v479
        %v506 = vpack.c.b16 %v482, %v480
        %v507 = vpack.c.b16 %v485, %v483
        %v508 = vpack.c.b16 %v486, %v484
        %v509 = vpack.c.b16 %v489, %v487
        %v510 = vpack.c.b16 %v490, %v488
        %v511 = vpack.c.b16 %v493, %v491
        %v512 = vpack.c.b16 %v494, %v492
        %v513 = vpack.c.b16 %v497, %v495
        %v514 = vpack.c.b16 %v498, %v496
        %531 = vmatprep.subr.bf16.mxu0 %v514
        %532 = vmatpush1.bf16.xpose.msra.mxu0 %v513
        %533 = vmatprep.subr.bf16.mxu0 %v512
        %534 = vmatpush1.bf16.xpose.msra.mxu0 %v511
        %535 = vmatprep.subr.bf16.mxu0 %v510
        %536 = vmatpush1.bf16.xpose.msra.mxu0 %v509
        %537 = vmatprep.subr.bf16.mxu0 %v508
        %538 = vmatpush1.bf16.xpose.msra.mxu0 %v507
        %539 = vmatprep.subr.bf16.mxu0 %v506
        %540 = vmatpush1.bf16.xpose.msra.mxu0 %v505
        %541 = vmatprep.subr.bf16.mxu0 %v504
        %542 = vmatpush1.bf16.xpose.msra.mxu0 %v503
        %543 = vmatprep.subr.bf16.mxu0 %v502
        %544 = vmatpush1.bf16.xpose.msra.mxu0 %v501
        %545 = vmatprep.subr.bf16.mxu0 %v500
        %546 = vmatpush1.bf16.xpose.msra.mxu0 %v499
        %547 = vmatprep.subr.bf16.mxu0 0
        %548 = vmatpush2.bf16.xpose.msra.mxu0 0
        %549 = vmatprep.subr.bf16.mxu0 0
        %550 = vmatpush2.bf16.xpose.msra.mxu0 0
        %551 = vmatprep.subr.bf16.mxu0 0
        %552 = vmatpush2.bf16.xpose.msra.mxu0 0
        %553 = vmatprep.subr.bf16.mxu0 0
        %554 = vmatpush2.bf16.xpose.msra.mxu0 0
        %555 = vmatprep.subr.bf16.mxu0 0
        %556 = vmatpush2.bf16.xpose.msra.mxu0 0
        %557 = vmatprep.subr.bf16.mxu0 0
        %558 = vmatpush2.bf16.xpose.msra.mxu0 0
        %559 = vmatprep.subr.bf16.mxu0 0
        %560 = vmatpush2.bf16.xpose.msra.mxu0 0
        %561 = vmatprep.subr.bf16.mxu0 0
        %562 = vmatpush2.bf16.xpose.msra.mxu0 0
        %563 = vmatprep.mubr.bf16.mxu0 %v434
        %564 = vmatmul.mubr.bf16.gmra.mxu0 %v433
        %v565 = vpop.f32.mrf.mxu0
        %v566 = vadd.f32 0.0, %v565
        %v567 = vpop.f32.mrf.mxu0
        %v568 = vpop.f32.mrf.mxu0
        %v569 = vpop.f32.mrf.mxu0
        %570 = vdwg.mxu0
        %v587 = vunpack.c.l.b16 %v413
        %v588 = vunpack.c.h.b16 %v413
        %v589 = vunpack.c.l.b16 %v414
        %v590 = vunpack.c.h.b16 %v414
        %v591 = vunpack.c.l.b16 %v415
        %v592 = vunpack.c.h.b16 %v415
        %v593 = vunpack.c.l.b16 %v416
        %v594 = vunpack.c.h.b16 %v416
        %v595 = vunpack.c.l.b16 %v417
        %v596 = vunpack.c.h.b16 %v417
        %v597 = vunpack.c.l.b16 %v418
        %v598 = vunpack.c.h.b16 %v418
        %v599 = vunpack.c.l.b16 %v419
        %v600 = vunpack.c.h.b16 %v419
        %v601 = vunpack.c.l.b16 %v420
        %v602 = vunpack.c.h.b16 %v420
        %v603 = vunpack.c.l.b16 %v421
        %v604 = vunpack.c.h.b16 %v421
        %v605 = vunpack.c.l.b16 %v422
        %v606 = vunpack.c.h.b16 %v422
        %v607 = vunpack.c.l.b16 %v423
        %v608 = vunpack.c.h.b16 %v423
        %v609 = vunpack.c.l.b16 %v424
        %v610 = vunpack.c.h.b16 %v424
        %v611 = vunpack.c.l.b16 %v425
        %v612 = vunpack.c.h.b16 %v425
        %v613 = vunpack.c.l.b16 %v426
        %v614 = vunpack.c.h.b16 %v426
        %v615 = vunpack.c.l.b16 %v427
        %v616 = vunpack.c.h.b16 %v427
        %v617 = vunpack.c.l.b16 %v428
        %v618 = vunpack.c.h.b16 %v428
        %v619 = vpack.c.b16 %v589, %v587
        %v620 = vpack.c.b16 %v590, %v588
        %v621 = vpack.c.b16 %v593, %v591
        %v622 = vpack.c.b16 %v594, %v592
        %v623 = vpack.c.b16 %v597, %v595
        %v624 = vpack.c.b16 %v598, %v596
        %v625 = vpack.c.b16 %v601, %v599
        %v626 = vpack.c.b16 %v602, %v600
        %v627 = vpack.c.b16 %v605, %v603
        %v628 = vpack.c.b16 %v606, %v604
        %v629 = vpack.c.b16 %v609, %v607
        %v630 = vpack.c.b16 %v610, %v608
        %v631 = vpack.c.b16 %v613, %v611
        %v632 = vpack.c.b16 %v614, %v612
        %v633 = vpack.c.b16 %v617, %v615
        %v634 = vpack.c.b16 %v618, %v616
        %651 = vmatprep.subr.bf16.mxu0 %v634
        %652 = vmatpush1.bf16.xpose.msra.mxu0 %v633
        %653 = vmatprep.subr.bf16.mxu0 %v632
        %654 = vmatpush1.bf16.xpose.msra.mxu0 %v631
        %655 = vmatprep.subr.bf16.mxu0 %v630
        %656 = vmatpush1.bf16.xpose.msra.mxu0 %v629
        %657 = vmatprep.subr.bf16.mxu0 %v628
        %658 = vmatpush1.bf16.xpose.msra.mxu0 %v627
        %659 = vmatprep.subr.bf16.mxu0 %v626
        %660 = vmatpush1.bf16.xpose.msra.mxu0 %v625
        %661 = vmatprep.subr.bf16.mxu0 %v624
        %662 = vmatpush1.bf16.xpose.msra.mxu0 %v623
        %663 = vmatprep.subr.bf16.mxu0 %v622
        %664 = vmatpush1.bf16.xpose.msra.mxu0 %v621
        %665 = vmatprep.subr.bf16.mxu0 %v620
        %666 = vmatpush1.bf16.xpose.msra.mxu0 %v619
        %667 = vmatprep.subr.bf16.mxu0 0
        %668 = vmatpush2.bf16.xpose.msra.mxu0 0
        %669 = vmatprep.subr.bf16.mxu0 0
        %670 = vmatpush2.bf16.xpose.msra.mxu0 0
        %671 = vmatprep.subr.bf16.mxu0 0
        %672 = vmatpush2.bf16.xpose.msra.mxu0 0
        %673 = vmatprep.subr.bf16.mxu0 0
        %674 = vmatpush2.bf16.xpose.msra.mxu0 0
        %675 = vmatprep.subr.bf16.mxu0 0
        %676 = vmatpush2.bf16.xpose.msra.mxu0 0
        %677 = vmatprep.subr.bf16.mxu0 0
        %678 = vmatpush2.bf16.xpose.msra.mxu0 0
        %679 = vmatprep.subr.bf16.mxu0 0
        %680 = vmatpush2.bf16.xpose.msra.mxu0 0
        %681 = vmatprep.subr.bf16.mxu0 0
        %682 = vmatpush2.bf16.xpose.msra.mxu0 0
        %683 = vmatprep.mubr.bf16.mxu0 %v412
        %684 = vmatmul.mubr.bf16.gmra.mxu0 %v411
        %v685 = vpop.f32.mrf.mxu0
        %v686 = vadd.f32 %v566, %v685
        %v687 = vpop.f32.mrf.mxu0
        %v688 = vpop.f32.mrf.mxu0
        %v689 = vpop.f32.mrf.mxu0
        %690 = vdwg.mxu0
        %s691 = sld [smem:[#allocation2 + $0x1]]
        %v692 = vstv %s691
        %v693 = vmul.f32 %v692, %v409
        %v694 = vmul.f32 %v692, %v410
        %v695 = vpack.c.bf16 %v693, %v693
        %v696 = vpack.c.bf16 %v694, %v694
        %s697 = scalar_lea.vmem %s329, 128 [#allocation6]
        %v698 = vld [vmem:[%s697] sm:$0xff]
        %v699 = vld [vmem:[%s697 + $0x8] sm:$0xff]
        %v700 = vld [vmem:[%s697 + $0x10] sm:$0xff]
        %v701 = vld [vmem:[%s697 + $0x18] sm:$0xff]
        %v702 = vld [vmem:[%s697 + $0x20] sm:$0xff]
        %v703 = vld [vmem:[%s697 + $0x28] sm:$0xff]
        %v704 = vld [vmem:[%s697 + $0x30] sm:$0xff]
        %v705 = vld [vmem:[%s697 + $0x38] sm:$0xff]
        %v706 = vld [vmem:[%s697 + $0x40] sm:$0xff]
        %v707 = vld [vmem:[%s697 + $0x48] sm:$0xff]
        %v708 = vld [vmem:[%s697 + $0x50] sm:$0xff]
        %v709 = vld [vmem:[%s697 + $0x58] sm:$0xff]
        %v710 = vld [vmem:[%s697 + $0x60] sm:$0xff]
        %v711 = vld [vmem:[%s697 + $0x68] sm:$0xff]
        %v712 = vld [vmem:[%s697 + $0x70] sm:$0xff]
        %v713 = vld [vmem:[%s697 + $0x78] sm:$0xff]
        %v730 = vunpack.c.l.b16 %v698
        %v731 = vunpack.c.h.b16 %v698
        %v732 = vunpack.c.l.b16 %v699
        %v733 = vunpack.c.h.b16 %v699
        %v734 = vunpack.c.l.b16 %v700
        %v735 = vunpack.c.h.b16 %v700
        %v736 = vunpack.c.l.b16 %v701
        %v737 = vunpack.c.h.b16 %v701
        %v738 = vunpack.c.l.b16 %v702
        %v739 = vunpack.c.h.b16 %v702
        %v740 = vunpack.c.l.b16 %v703
        %v741 = vunpack.c.h.b16 %v703
        %v742 = vunpack.c.l.b16 %v704
        %v743 = vunpack.c.h.b16 %v704
        %v744 = vunpack.c.l.b16 %v705
        %v745 = vunpack.c.h.b16 %v705
        %v746 = vunpack.c.l.b16 %v706
        %v747 = vunpack.c.h.b16 %v706
        %v748 = vunpack.c.l.b16 %v707
        %v749 = vunpack.c.h.b16 %v707
        %v750 = vunpack.c.l.b16 %v708
        %v751 = vunpack.c.h.b16 %v708
        %v752 = vunpack.c.l.b16 %v709
        %v753 = vunpack.c.h.b16 %v709
        %v754 = vunpack.c.l.b16 %v710
        %v755 = vunpack.c.h.b16 %v710
        %v756 = vunpack.c.l.b16 %v711
        %v757 = vunpack.c.h.b16 %v711
        %v758 = vunpack.c.l.b16 %v712
        %v759 = vunpack.c.h.b16 %v712
        %v760 = vunpack.c.l.b16 %v713
        %v761 = vunpack.c.h.b16 %v713
        %v762 = vpack.c.b16 %v732, %v730
        %v763 = vpack.c.b16 %v733, %v731
        %v764 = vpack.c.b16 %v736, %v734
        %v765 = vpack.c.b16 %v737, %v735
        %v766 = vpack.c.b16 %v740, %v738
        %v767 = vpack.c.b16 %v741, %v739
        %v768 = vpack.c.b16 %v744, %v742
        %v769 = vpack.c.b16 %v745, %v743
        %v770 = vpack.c.b16 %v748, %v746
        %v771 = vpack.c.b16 %v749, %v747
        %v772 = vpack.c.b16 %v752, %v750
        %v773 = vpack.c.b16 %v753, %v751
        %v774 = vpack.c.b16 %v756, %v754
        %v775 = vpack.c.b16 %v757, %v755
        %v776 = vpack.c.b16 %v760, %v758
        %v777 = vpack.c.b16 %v761, %v759
        %794 = vmatprep.subr.bf16.mxu0 %v777
        %795 = vmatpush1.bf16.xpose.msra.mxu0 %v776
        %796 = vmatprep.subr.bf16.mxu0 %v775
        %797 = vmatpush1.bf16.xpose.msra.mxu0 %v774
        %798 = vmatprep.subr.bf16.mxu0 %v773
        %799 = vmatpush1.bf16.xpose.msra.mxu0 %v772
        %800 = vmatprep.subr.bf16.mxu0 %v771
        %801 = vmatpush1.bf16.xpose.msra.mxu0 %v770
        %802 = vmatprep.subr.bf16.mxu0 %v769
        %803 = vmatpush1.bf16.xpose.msra.mxu0 %v768
        %804 = vmatprep.subr.bf16.mxu0 %v767
        %805 = vmatpush1.bf16.xpose.msra.mxu0 %v766
        %806 = vmatprep.subr.bf16.mxu0 %v765
        %807 = vmatpush1.bf16.xpose.msra.mxu0 %v764
        %808 = vmatprep.subr.bf16.mxu0 %v763
        %809 = vmatpush1.bf16.xpose.msra.mxu0 %v762
        %810 = vmatprep.subr.bf16.mxu0 0
        %811 = vmatpush2.bf16.xpose.msra.mxu0 0
        %812 = vmatprep.subr.bf16.mxu0 0
        %813 = vmatpush2.bf16.xpose.msra.mxu0 0
        %814 = vmatprep.subr.bf16.mxu0 0
        %815 = vmatpush2.bf16.xpose.msra.mxu0 0
        %816 = vmatprep.subr.bf16.mxu0 0
        %817 = vmatpush2.bf16.xpose.msra.mxu0 0
        %818 = vmatprep.subr.bf16.mxu0 0
        %819 = vmatpush2.bf16.xpose.msra.mxu0 0
        %820 = vmatprep.subr.bf16.mxu0 0
        %821 = vmatpush2.bf16.xpose.msra.mxu0 0
        %822 = vmatprep.subr.bf16.mxu0 0
        %823 = vmatpush2.bf16.xpose.msra.mxu0 0
        %824 = vmatprep.subr.bf16.mxu0 0
        %825 = vmatpush2.bf16.xpose.msra.mxu0 0
        %826 = vmatprep.mubr.bf16.mxu0 %v696
        %827 = vmatmul.mubr.bf16.gmra.mxu0 %v695
        %v828 = vpop.f32.mrf.mxu0
        %v829 = vadd.f32 0.0, %v828
        %v830 = vpop.f32.mrf.mxu0
        %v831 = vpop.f32.mrf.mxu0
        %v832 = vpop.f32.mrf.mxu0
        %833 = vdwg.mxu0
        %v834 = vadd.f32 %v686, %v829
        %s835 = sld [smem:[#allocation2 + $0x2]]
        %v836 = vstv %s835
        %v837 = vmul.f32 %v836, %v409
        %v838 = vmul.f32 %v836, %v410
        %v839 = vpack.c.bf16 %v837, %v837
        %v840 = vpack.c.bf16 %v838, %v838
        %s841 = scalar_lea.vmem %s329, 256 [#allocation6]
        %v842 = vld [vmem:[%s841] sm:$0xff]
        %v843 = vld [vmem:[%s841 + $0x8] sm:$0xff]
        %v844 = vld [vmem:[%s841 + $0x10] sm:$0xff]
        %v845 = vld [vmem:[%s841 + $0x18] sm:$0xff]
        %v846 = vld [vmem:[%s841 + $0x20] sm:$0xff]
        %v847 = vld [vmem:[%s841 + $0x28] sm:$0xff]
        %v848 = vld [vmem:[%s841 + $0x30] sm:$0xff]
        %v849 = vld [vmem:[%s841 + $0x38] sm:$0xff]
        %v850 = vld [vmem:[%s841 + $0x40] sm:$0xff]
        %v851 = vld [vmem:[%s841 + $0x48] sm:$0xff]
        %v852 = vld [vmem:[%s841 + $0x50] sm:$0xff]
        %v853 = vld [vmem:[%s841 + $0x58] sm:$0xff]
        %v854 = vld [vmem:[%s841 + $0x60] sm:$0xff]
        %v855 = vld [vmem:[%s841 + $0x68] sm:$0xff]
        %v856 = vld [vmem:[%s841 + $0x70] sm:$0xff]
        %v857 = vld [vmem:[%s841 + $0x78] sm:$0xff]
        %v874 = vunpack.c.l.b16 %v842
        %v875 = vunpack.c.h.b16 %v842
        %v876 = vunpack.c.l.b16 %v843
        %v877 = vunpack.c.h.b16 %v843
        %v878 = vunpack.c.l.b16 %v844
        %v879 = vunpack.c.h.b16 %v844
        %v880 = vunpack.c.l.b16 %v845
        %v881 = vunpack.c.h.b16 %v845
        %v882 = vunpack.c.l.b16 %v846
        %v883 = vunpack.c.h.b16 %v846
        %v884 = vunpack.c.l.b16 %v847
        %v885 = vunpack.c.h.b16 %v847
        %v886 = vunpack.c.l.b16 %v848
        %v887 = vunpack.c.h.b16 %v848
        %v888 = vunpack.c.l.b16 %v849
        %v889 = vunpack.c.h.b16 %v849
        %v890 = vunpack.c.l.b16 %v850
        %v891 = vunpack.c.h.b16 %v850
        %v892 = vunpack.c.l.b16 %v851
        %v893 = vunpack.c.h.b16 %v851
        %v894 = vunpack.c.l.b16 %v852
        %v895 = vunpack.c.h.b16 %v852
        %v896 = vunpack.c.l.b16 %v853
        %v897 = vunpack.c.h.b16 %v853
        %v898 = vunpack.c.l.b16 %v854
        %v899 = vunpack.c.h.b16 %v854
        %v900 = vunpack.c.l.b16 %v855
        %v901 = vunpack.c.h.b16 %v855
        %v902 = vunpack.c.l.b16 %v856
        %v903 = vunpack.c.h.b16 %v856
        %v904 = vunpack.c.l.b16 %v857
        %v905 = vunpack.c.h.b16 %v857
        %v906 = vpack.c.b16 %v876, %v874
        %v907 = vpack.c.b16 %v877, %v875
        %v908 = vpack.c.b16 %v880, %v878
        %v909 = vpack.c.b16 %v881, %v879
        %v910 = vpack.c.b16 %v884, %v882
        %v911 = vpack.c.b16 %v885, %v883
        %v912 = vpack.c.b16 %v888, %v886
        %v913 = vpack.c.b16 %v889, %v887
        %v914 = vpack.c.b16 %v892, %v890
        %v915 = vpack.c.b16 %v893, %v891
        %v916 = vpack.c.b16 %v896, %v894
        %v917 = vpack.c.b16 %v897, %v895
        %v918 = vpack.c.b16 %v900, %v898
        %v919 = vpack.c.b16 %v901, %v899
        %v920 = vpack.c.b16 %v904, %v902
        %v921 = vpack.c.b16 %v905, %v903
        %938 = vmatprep.subr.bf16.mxu0 %v921
        %939 = vmatpush1.bf16.xpose.msra.mxu0 %v920
        %940 = vmatprep.subr.bf16.mxu0 %v919
        %941 = vmatpush1.bf16.xpose.msra.mxu0 %v918
        %942 = vmatprep.subr.bf16.mxu0 %v917
        %943 = vmatpush1.bf16.xpose.msra.mxu0 %v916
        %944 = vmatprep.subr.bf16.mxu0 %v915
        %945 = vmatpush1.bf16.xpose.msra.mxu0 %v914
        %946 = vmatprep.subr.bf16.mxu0 %v913
        %947 = vmatpush1.bf16.xpose.msra.mxu0 %v912
        %948 = vmatprep.subr.bf16.mxu0 %v911
        %949 = vmatpush1.bf16.xpose.msra.mxu0 %v910
        %950 = vmatprep.subr.bf16.mxu0 %v909
        %951 = vmatpush1.bf16.xpose.msra.mxu0 %v908
        %952 = vmatprep.subr.bf16.mxu0 %v907
        %953 = vmatpush1.bf16.xpose.msra.mxu0 %v906
        %954 = vmatprep.subr.bf16.mxu0 0
        %955 = vmatpush2.bf16.xpose.msra.mxu0 0
        %956 = vmatprep.subr.bf16.mxu0 0
        %957 = vmatpush2.bf16.xpose.msra.mxu0 0
        %958 = vmatprep.subr.bf16.mxu0 0
        %959 = vmatpush2.bf16.xpose.msra.mxu0 0
        %960 = vmatprep.subr.bf16.mxu0 0
        %961 = vmatpush2.bf16.xpose.msra.mxu0 0
        %962 = vmatprep.subr.bf16.mxu0 0
        %963 = vmatpush2.bf16.xpose.msra.mxu0 0
        %964 = vmatprep.subr.bf16.mxu0 0
        %965 = vmatpush2.bf16.xpose.msra.mxu0 0
        %966 = vmatprep.subr.bf16.mxu0 0
        %967 = vmatpush2.bf16.xpose.msra.mxu0 0
        %968 = vmatprep.subr.bf16.mxu0 0
        %969 = vmatpush2.bf16.xpose.msra.mxu0 0
        %970 = vmatprep.mubr.bf16.mxu0 %v840
        %971 = vmatmul.mubr.bf16.gmra.mxu0 %v839
        %v972 = vpop.f32.mrf.mxu0
        %v973 = vadd.f32 0.0, %v972
        %v974 = vpop.f32.mrf.mxu0
        %v975 = vpop.f32.mrf.mxu0
        %v976 = vpop.f32.mrf.mxu0
        %977 = vdwg.mxu0
        %v978 = vadd.f32 %v834, %v973
        %v979 = vld [vmem:[%s387] sm:$0xff]
        %v980 = vadd.f32 %v979, %v978
        %981 = vst [vmem:[%s387] sm:$0xff] %v980
        %s982 = sand.u32 %s175, 1
        %s983 = scalar_lea.sflag [#allocation4], %s982
        %s984 = sand.u32 %s175, 1
        %s985 = smul.addr %s984, 8
        %s986 = scalar_lea.vmem [#allocation10], %s985
        // Predicated region
        $region61: #{tpu_custom_call.1} parent=39 // pred_check
          %p987 = pneg %p185
        $region62: #{tpu_custom_call.1} parent=39 // pred_check_branch
          %989 = sbr.rel (%p987) target = $region64
        $region63: #{tpu_custom_call.1} parent=39 // pred_region
          %s991 = ssub.s32 128, 128
          %992 = vsyncadd %s983, %s991
          %s993 = smul.addr %s30, 128
          %s994 = scalar_lea.hbm %s5, %s993
          %s996 = sshll.u32 %s986, 4
          %s997 = int_to_ptr.vmem [resolvable:$true] %s996
          %999 = dma.vmem_to_hbm [thread:$0]  %s997, 128, %s994, %s983
        $region64: #{tpu_custom_call.1} parent=39 // pred_fallthru
          _
      $region40: #{tpu_custom_call.1} parent=5 // pred_fallthru
        _
      %p1000 = scmp.le.s32.totalorder 2, %s21
      // Predicated region
      $region65: #{tpu_custom_call.1} parent=5 // pred_check
        %p1001 = pneg %p1000
      $region66: #{tpu_custom_call.1} parent=5 // pred_check_branch
        %1003 = sbr.rel (%p1001) target = $region68
      $region67: #{tpu_custom_call.1} parent=5 // pred_region
        %s1004 = ssub.s32 %s21, 2
        // Predicated region
        $region69: #{tpu_custom_call.1} parent=67 // pred_check
          %p1005 = pneg %p191
        $region70: #{tpu_custom_call.1} parent=67 // pred_check_branch
          %1007 = sbr.rel (%p1005) target = $region72
        $region71: #{tpu_custom_call.1} parent=67 // pred_region
          %s1008 = sand.u32 %s176, 1
          %s1009 = scalar_lea.sflag [#allocation4], %s1008
          %s1010 = sand.u32 %s176, 1
          %s1011 = smul.addr %s1010, 8
          %s1012 = scalar_lea.vmem [#allocation10], %s1011
          %1013 = dma.done %s1009, 128
        $region72: #{tpu_custom_call.1} parent=67 // pred_fallthru
          _
      $region68: #{tpu_custom_call.1} parent=5 // pred_fallthru
        _
    $region6: #{tpu_custom_call.1} parent=1 // loop_footer
      %s25 = sadd.s32 1, %s21
    $region7: #{tpu_custom_call.1} parent=1 // loop_footer_branch
      %20 = sbr.rel target = $region3
    $region8: #{tpu_custom_call.1} parent=1 // loop_exit
      _
    %1014 = vsyncpa [#allocation3], 1
    %s1015 = scalar_lea.sflag [#allocation3], 1
    %1016 = vsyncpa %s1015, 1
    %1017 = vsyncpa [#allocation8], 1
    %s1018 = scalar_lea.sflag [#allocation8], 1
    %1019 = vsyncpa %s1018, 1
    %1020 = vsyncpa [#allocation4], 1
    %s1021 = scalar_lea.sflag [#allocation4], 1
    %1022 = vsyncpa %s1021, 1
    %1023 = vsyncpa [#allocation5], 1
    %s1024 = scalar_lea.sflag [#allocation5], 1
    %1025 = vsyncpa %s1024, 1

</llo_original>
